<compile_context>
chip_gen: v5e
topology: v5e:2x2
jax: 0.10.0
libtpu: 0.0.40
codegen_flags: <defaults>
</compile_context>

<pallas_src>
import jax
import jax.numpy as jnp
from jax.experimental import pallas as pl
from jax.experimental.pallas import tpu as pltpu

N_BINS = 36
LEAKY_SLOPE = 0.2
_TILE_B_CAP = 8192      # rows per grid step (multiple of 8)
_MIN_GRID_STEPS = 4     # keep >=4 steps for large B so both v7x TCs get work


def _leaky_relu(x, slope=LEAKY_SLOPE):
    # max(x, slope*x) == LeakyReLU for 0 < slope < 1.
    return jnp.maximum(x, slope * x)


def str_mlp_kernel(x_ref, w_ref, b_ref, o_ref):
    # x_ref: (tile_b, 36)  activation tile, streamed / double-buffered, f32
    # w_ref: (3, 36, 36)   stacked weights pre-transposed to (in, out),
    #                      VMEM-resident, dtype == matmul operand dtype
    # b_ref: (3, 1, 36)    stacked biases, VMEM-resident, f32
    mm_dtype = w_ref.dtype
    x = x_ref[...]

    h = jnp.dot(x.astype(mm_dtype), w_ref[0],
                preferred_element_type=jnp.float32) + b_ref[0]
    h = _leaky_relu(h)

    h = jnp.dot(h.astype(mm_dtype), w_ref[1],
                preferred_element_type=jnp.float32) + b_ref[1]
    h = _leaky_relu(h)

    out = jnp.dot(h.astype(mm_dtype), w_ref[2],
                  preferred_element_type=jnp.float32) + b_ref[2]
    o_ref[...] = out.astype(o_ref.dtype)


def pack_params(params, matmul_dtype=jnp.bfloat16):
    """One-time parameter prep (call at load time, NOT per forward).

    PyTorch Linear stores weight as (out, in) and computes x @ W.T + b; we
    pre-transpose to (in, out), stack the 3 layers, and store the weights in
    the matmul operand dtype (bf16 by default; use jnp.float32 for tight
    numerics). Biases stay f32 and are added post-accumulation.
    """
    w_packed = jnp.stack(
        [params["W1"].T, params["W2"].T, params["W3"].T]
    ).astype(matmul_dtype)                                   # (3, 36, 36)
    b_packed = jnp.stack(
        [params["b1"], params["b2"], params["b3"]]
    ).reshape(3, 1, N_BINS).astype(jnp.float32)              # (3, 1, 36)
    return w_packed, b_packed


def _choose_tile_b(batch, cap):
    """Pick rows/grid-step: big enough to amortize step overhead, small enough
    to stay VMEM-safe, and >= _MIN_GRID_STEPS steps for large B (megacore)."""
    if batch <= 8:
        return batch                              # full-dim block is legal
    target = pl.cdiv(batch, _MIN_GRID_STEPS)
    target = ((target + 7) // 8) * 8              # 2nd-to-last dim multiple of 8
    return max(8, min(cap, target))


def str_mlp_forward(x, w_packed, b_packed, *, tile_b_cap=_TILE_B_CAP):
    """x: (B, 36) float32 -> (B, 36) float32."""
    B, F = x.shape
    assert F == N_BINS

    tile_b = _choose_tile_b(B, tile_b_cap)
    grid = (pl.cdiv(B, tile_b),)
    # Tail blocks (B % tile_b != 0) compute on padded garbage rows; this is
    # safe: the contraction is only over the fully-valid K=36 axis and padded
    # output rows are clipped on writeback.

    x_bytes = jnp.dtype(x.dtype).itemsize
    cost = pl.CostEstimate(
        flops=6 * B * N_BINS * N_BINS,            # 3 matmuls x 2*M*K*N
        transcendentals=0,
        bytes_accessed=(
            2 * B * N_BINS * x_bytes
            + w_packed.size * jnp.dtype(w_packed.dtype).itemsize
            + b_packed.size * jnp.dtype(b_packed.dtype).itemsize
        ),
    )

    return pl.pallas_call(
        str_mlp_kernel,
        out_shape=jax.ShapeDtypeStruct((B, N_BINS), x.dtype),
        grid=grid,
        in_specs=[
            # Batch-tiled activation stream (double-buffered by Pallas).
            pl.BlockSpec((tile_b, N_BINS), lambda i: (i, 0)),
            # Weights/biases: constant index_map -> stay resident in VMEM.
            pl.BlockSpec((3, N_BINS, N_BINS), lambda i: (0, 0, 0)),
            pl.BlockSpec((3, 1, N_BINS), lambda i: (0, 0, 0)),
        ],
        out_specs=pl.BlockSpec((tile_b, N_BINS), lambda i: (i, 0)),
        compiler_params=pltpu.CompilerParams(
            # Batch axis is embarrassingly parallel -> v7x megacore sharding.
            dimension_semantics=("parallel",),
            vmem_limit_bytes=32 * 1024 * 1024,
        ),
        cost_estimate=cost,
    )(x, w_packed, b_packed)


def init_params(key):
    """Deterministic synthetic init matching nn.Linear(36, 36) shapes."""
    keys = jax.random.split(key, 6)
    bound = 1.0 / (N_BINS ** 0.5)  # same bound PyTorch uses for Linear init
    u = lambda k, shape: jax.random.uniform(
        k, shape, dtype=jnp.float32, minval=-bound, maxval=bound
    )
    return {
        "W1": u(keys[0], (N_BINS, N_BINS)),
        "b1": u(keys[1], (N_BINS,)),
        "W2": u(keys[2], (N_BINS, N_BINS)),
        "b2": u(keys[3], (N_BINS,)),
        "W3": u(keys[4], (N_BINS, N_BINS)),
        "b3": u(keys[5], (N_BINS,)),
    }


def _reference_forward(x, params):
    # Pure-JAX f32 reference mirroring the PyTorch forward (dropout = identity).
    h = x @ params["W1"].T + params["b1"]
    h = jnp.where(h > 0, h, LEAKY_SLOPE * h)
    h = h @ params["W2"].T + params["b2"]
    h = jnp.where(h > 0, h, LEAKY_SLOPE * h)
    return h @ params["W3"].T + params["b3"]


if __name__ == "__main__":
    key = jax.random.PRNGKey(0)
    pkey, xkey1, xkey2, xkey3 = jax.random.split(key, 4)

    params = init_params(pkey)
    # One-time packs (hoisted out of forward): bf16 matmul operands (default,
    # fast path) and an f32 pack for the tight-numerics check.
    w_bf16, b_packed = pack_params(params)                       # default: bf16
    w_f32, _ = pack_params(params, matmul_dtype=jnp.float32)

    # Case 1: f32-weight path, tiny batch, single grid step -> tight tolerance.
    batch = 8
    x = jax.random.normal(xkey1, (batch, N_BINS), dtype=jnp.float32)
    out = jax.block_until_ready(str_mlp_forward(x, w_f32, b_packed))
    ref = _reference_forward(x, params)
    assert out.shape == (batch, N_BINS)
    assert jnp.allclose(out, ref, atol=1e-5, rtol=1e-5)

    # Case 2: bf16 matmul path, tiled grid with tail block (B % tile_b != 0).
    batch2 = 20
    x2 = jax.random.normal(xkey2, (batch2, N_BINS), dtype=jnp.float32)
    out2 = jax.block_until_ready(
        str_mlp_forward(x2, w_bf16, b_packed, tile_b_cap=8)
    )
    ref2 = _reference_forward(x2, params)
    assert out2.shape == (batch2, N_BINS)
    assert jnp.allclose(out2, ref2, atol=5e-2, rtol=5e-2)

    # Case 3: bf16 matmul path, default tiling -> >= 4 grid steps (megacore).
    batch3 = 64
    x3 = jax.random.normal(xkey3, (batch3, N_BINS), dtype=jnp.float32)
    out3 = jax.block_until_ready(str_mlp_forward(x3, w_bf16, b_packed))
    ref3 = _reference_forward(x3, params)
    assert out3.shape == (batch3, N_BINS)
    assert jnp.allclose(out3, ref3, atol=5e-2, rtol=5e-2)

    print("KERNEL_OK")
</pallas_src>

<mosaic_0001>
module attributes {stable_mosaic.version = 11 : i64} {
  func.func @str_mlp_kernel(%arg0: i32, %arg1: memref<8x36xf32, #tpu.memory_space<vmem>>, %arg2: memref<3x36x36xf32, #tpu.memory_space<vmem>>, %arg3: memref<3x1x36xf32, #tpu.memory_space<vmem>>, %arg4: memref<8x36xf32, #tpu.memory_space<vmem>>) attributes {dimension_semantics = [#tpu.dimension_semantics<parallel>], iteration_bounds = array<i64: 1>, scalar_prefetch = 0 : i64, scratch_operands = 0 : i64, tpu.core_type = #tpu.core_type<tc>, window_params = [{transform_indices = @transform_0, window_bounds = array<i64: 8, 36>}, {pipeline_mode = #tpu.pipeline_mode<synchronous>, transform_indices = @transform_1, window_bounds = array<i64: 3, 36, 36>}, {pipeline_mode = #tpu.pipeline_mode<synchronous>, transform_indices = @transform_2, window_bounds = array<i64: 3, 1, 36>}, {transform_indices = @transform_3, window_bounds = array<i64: 8, 36>}]} {
    %c0 = arith.constant 0 : index
    %c0_0 = arith.constant 0 : index
    %0 = vector.load %arg1[%c0, %c0_0] : memref<8x36xf32, #tpu.memory_space<vmem>>, vector<8x36xf32>
    %c0_1 = arith.constant 0 : index
    %c0_2 = arith.constant 0 : index
    %c0_3 = arith.constant 0 : index
    %1 = vector.load %arg2[%c0_1, %c0_2, %c0_3] : memref<3x36x36xf32, #tpu.memory_space<vmem>>, vector<1x36x36xf32>
    %2 = vector.shape_cast %1 : vector<1x36x36xf32> to vector<36x36xf32>
    %cst = arith.constant dense<0.000000e+00> : vector<8x36xf32>
    %3 = tpu.matmul %0, %2, %cst {dimension_numbers = #tpu.dot_dimension_numbers<[1], [0], [0], [1], [0, 0, 1, 1], [], []>} : vector<8x36xf32>, vector<36x36xf32>, vector<8x36xf32> -> vector<8x36xf32>
    %c0_4 = arith.constant 0 : index
    %c0_5 = arith.constant 0 : index
    %c0_6 = arith.constant 0 : index
    %4 = vector.load %arg3[%c0_4, %c0_5, %c0_6] : memref<3x1x36xf32, #tpu.memory_space<vmem>>, vector<1x1x36xf32>
    %5 = vector.shape_cast %4 : vector<1x1x36xf32> to vector<1x36xf32>
    %6 = vector.broadcast %5 : vector<1x36xf32> to vector<8x36xf32>
    %7 = arith.addf %3, %6 : vector<8x36xf32>
    %cst_7 = arith.constant 2.000000e-01 : f32
    %8 = vector.broadcast %cst_7 : f32 to vector<8x36xf32>
    %9 = arith.mulf %8, %7 : vector<8x36xf32>
    %10 = arith.maximumf %7, %9 : vector<8x36xf32>
    %c1 = arith.constant 1 : index
    %c0_8 = arith.constant 0 : index
    %c0_9 = arith.constant 0 : index
    %11 = vector.load %arg2[%c1, %c0_8, %c0_9] : memref<3x36x36xf32, #tpu.memory_space<vmem>>, vector<1x36x36xf32>
    %12 = vector.shape_cast %11 : vector<1x36x36xf32> to vector<36x36xf32>
    %cst_10 = arith.constant dense<0.000000e+00> : vector<8x36xf32>
    %13 = tpu.matmul %10, %12, %cst_10 {dimension_numbers = #tpu.dot_dimension_numbers<[1], [0], [0], [1], [0, 0, 1, 1], [], []>} : vector<8x36xf32>, vector<36x36xf32>, vector<8x36xf32> -> vector<8x36xf32>
    %c1_11 = arith.constant 1 : index
    %c0_12 = arith.constant 0 : index
    %c0_13 = arith.constant 0 : index
    %14 = vector.load %arg3[%c1_11, %c0_12, %c0_13] : memref<3x1x36xf32, #tpu.memory_space<vmem>>, vector<1x1x36xf32>
    %15 = vector.shape_cast %14 : vector<1x1x36xf32> to vector<1x36xf32>
    %16 = vector.broadcast %15 : vector<1x36xf32> to vector<8x36xf32>
    %17 = arith.addf %13, %16 : vector<8x36xf32>
    %cst_14 = arith.constant 2.000000e-01 : f32
    %18 = vector.broadcast %cst_14 : f32 to vector<8x36xf32>
    %19 = arith.mulf %18, %17 : vector<8x36xf32>
    %20 = arith.maximumf %17, %19 : vector<8x36xf32>
    %c2 = arith.constant 2 : index
    %c0_15 = arith.constant 0 : index
    %c0_16 = arith.constant 0 : index
    %21 = vector.load %arg2[%c2, %c0_15, %c0_16] : memref<3x36x36xf32, #tpu.memory_space<vmem>>, vector<1x36x36xf32>
    %22 = vector.shape_cast %21 : vector<1x36x36xf32> to vector<36x36xf32>
    %cst_17 = arith.constant dense<0.000000e+00> : vector<8x36xf32>
    %23 = tpu.matmul %20, %22, %cst_17 {dimension_numbers = #tpu.dot_dimension_numbers<[1], [0], [0], [1], [0, 0, 1, 1], [], []>} : vector<8x36xf32>, vector<36x36xf32>, vector<8x36xf32> -> vector<8x36xf32>
    %c2_18 = arith.constant 2 : index
    %c0_19 = arith.constant 0 : index
    %c0_20 = arith.constant 0 : index
    %24 = vector.load %arg3[%c2_18, %c0_19, %c0_20] : memref<3x1x36xf32, #tpu.memory_space<vmem>>, vector<1x1x36xf32>
    %25 = vector.shape_cast %24 : vector<1x1x36xf32> to vector<1x36xf32>
    %26 = vector.broadcast %25 : vector<1x36xf32> to vector<8x36xf32>
    %27 = arith.addf %23, %26 : vector<8x36xf32>
    %c0_21 = arith.constant 0 : index
    %c0_22 = arith.constant 0 : index
    %28 = vector.load %arg4[%c0_21, %c0_22] : memref<8x36xf32, #tpu.memory_space<vmem>>, vector<8x36xf32>
    tpu.vector_store %arg4[%c0_21, %c0_22], %27 {strides = array<i32>} : memref<8x36xf32, #tpu.memory_space<vmem>>, vector<8x36xf32>,
    return
  }
  func.func @transform_0(%arg0: i32) -> (i32, i32) {
    %c0_i32 = arith.constant 0 : i32
    %c0_i32_0 = arith.constant 0 : i32
    return %arg0, %c0_i32 : i32, i32
  }
  func.func @transform_1(%arg0: i32) -> (i32, i32, i32) {
    %c0_i32 = arith.constant 0 : i32
    %c0_i32_0 = arith.constant 0 : i32
    %c0_i32_1 = arith.constant 0 : i32
    %c0_i32_2 = arith.constant 0 : i32
    return %c0_i32, %c0_i32_0, %c0_i32_1 : i32, i32, i32
  }
  func.func @transform_2(%arg0: i32) -> (i32, i32, i32) {
    %c0_i32 = arith.constant 0 : i32
    %c0_i32_0 = arith.constant 0 : i32
    %c0_i32_1 = arith.constant 0 : i32
    %c0_i32_2 = arith.constant 0 : i32
    return %c0_i32, %c0_i32_0, %c0_i32_1 : i32, i32, i32
  }
  func.func @transform_3(%arg0: i32) -> (i32, i32) {
    %c0_i32 = arith.constant 0 : i32
    %c0_i32_0 = arith.constant 0 : i32
    return %arg0, %c0_i32 : i32, i32
  }
}

</mosaic_0001>

<llo_original>
// kernel: tpu_custom_call.1
$region0: #{tpu_custom_call.1}
  #allocation0 [shape = 'u32[]', space=smem, size = 0x4, offset = 0x4, fixed_abs, tag = 'smem constant byte address 0x4 - core index']
  #allocation1 [shape = 'u32[72,128]{1,0:T(1,128)}', space=vmem, size = 0x9000, scoped, tag = 'internal scratch']
  %s0 = inlined_call_operand.hbm [shape: f32[8,36], index: 0, kind: input, shape index: {}]
  %s1 = inlined_call_operand.hbm [shape: f32[3,36,36], index: 1, kind: input, shape index: {}]
  %s2 = inlined_call_operand.hbm [shape: f32[3,1,36], index: 2, kind: input, shape index: {}]
  %s3 = inlined_call_operand.hbm [shape: f32[8,36], index: 3, kind: output, shape index: {}]
  %s4 = sld [smem:[#allocation0]]
  $region34: #{tpu_custom_call.1} parent=0
    _
  %s6 = ssub.s32 1, %s4
  %s7 = scalar_select 0, %s6, %s4
  $region1: #{tpu_custom_call.1} parent=0
    #allocation2 [shape = 'u8[4096]{0}', space=vmem, size = 0x1000, scoped, tag = 'input window, operand 0, single buffered']
    #allocation3 [shape = 's32[1]{0}', space=sflag, size = 0x4, scoped, tag = 'scoped memory for tpu_custom_call.1']
    #allocation4 [shape = 's32[1]{0}', space=sflag, size = 0x4, scoped, tag = 'scoped memory for tpu_custom_call.1']
    #allocation5 [shape = 'u8[61440]{0}', space=vmem, size = 0xf000, scoped, tag = 'input window, operand 1, single buffered']
    #allocation6 [shape = 's32[1]{0}', space=sflag, size = 0x4, scoped, tag = 'scoped memory for tpu_custom_call.1']
    #allocation7 [shape = 'u8[1536]{0}', space=vmem, size = 0x800, scoped, tag = 'input window, operand 2, single buffered']
    #allocation8 [shape = 'u8[4096]{0}', space=vmem, size = 0x1000, scoped, tag = 'output window, operand 0, single buffered']
    %8 = vsyncpa [#allocation3], 0
    %9 = vsyncpa [#allocation6], 0
    %10 = vsyncpa [#allocation4], 0
    // Predicated region
    $region2: #{tpu_custom_call.1} parent=1 // pred_check
      _
    $region3: #{tpu_custom_call.1} parent=1 // pred_check_branch
      %12 = sbr.rel (0) target = $region5
    $region4: #{tpu_custom_call.1} parent=1 // pred_region
      %14 = vsyncadd [#allocation3], 0
      %s16 = sshll.u32 %s0, 4
      %s17 = int_to_ptr.hbm [resolvable:$true] %s16
      %s18 = sshll.u32 [#allocation2], 4
      %s19 = int_to_ptr.vmem [resolvable:$true] %s18
      %21 = dma.hbm_to_vmem [thread:$0]  %s17, 128, %s19, [#allocation3]
    $region5: #{tpu_custom_call.1} parent=1 // pred_fallthru
      _
    // Predicated region
    $region6: #{tpu_custom_call.1} parent=1 // pred_check
      _
    $region7: #{tpu_custom_call.1} parent=1 // pred_check_branch
      %23 = sbr.rel (0) target = $region9
    $region8: #{tpu_custom_call.1} parent=1 // pred_region
      %25 = vsyncadd [#allocation6], 0
      %s26 = sshll.u32 %s1, 4
      %s27 = int_to_ptr.hbm [resolvable:$true] %s26
      %s28 = sshll.u32 [#allocation5], 4
      %s29 = int_to_ptr.vmem [resolvable:$true] %s28
      %34 = dma.hbm_to_vmem [thread:$0]  %s27, 1920, %s29, [#allocation6], 128, 128, 8
    $region9: #{tpu_custom_call.1} parent=1 // pred_fallthru
      _
    // Predicated region
    $region10: #{tpu_custom_call.1} parent=1 // pred_check
      _
    $region11: #{tpu_custom_call.1} parent=1 // pred_check_branch
      %36 = sbr.rel (0) target = $region13
    $region12: #{tpu_custom_call.1} parent=1 // pred_region
      %38 = vsyncadd [#allocation6], 0
      %s39 = sshll.u32 %s2, 4
      %s40 = int_to_ptr.hbm [resolvable:$true] %s39
      %s41 = sshll.u32 [#allocation7], 4
      %s42 = int_to_ptr.vmem [resolvable:$true] %s41
      %47 = dma.hbm_to_vmem [thread:$0]  %s40, 48, %s42, [#allocation6], 16, 16, 1
    $region13: #{tpu_custom_call.1} parent=1 // pred_fallthru
      _
    // Predicated region
    $region14: #{tpu_custom_call.1} parent=1 // pred_check
      _
    $region15: #{tpu_custom_call.1} parent=1 // pred_check_branch
      %49 = sbr.rel (0) target = $region17
    $region16: #{tpu_custom_call.1} parent=1 // pred_region
      %51 = dma.done [#allocation3], 128
    $region17: #{tpu_custom_call.1} parent=1 // pred_fallthru
      _
    // Predicated region
    $region18: #{tpu_custom_call.1} parent=1 // pred_check
      _
    $region19: #{tpu_custom_call.1} parent=1 // pred_check_branch
      %53 = sbr.rel (0) target = $region21
    $region20: #{tpu_custom_call.1} parent=1 // pred_region
      %55 = dma.done [#allocation6], 1920
    $region21: #{tpu_custom_call.1} parent=1 // pred_fallthru
      _
    // Predicated region
    $region22: #{tpu_custom_call.1} parent=1 // pred_check
      _
    $region23: #{tpu_custom_call.1} parent=1 // pred_check_branch
      %57 = sbr.rel (0) target = $region25
    $region24: #{tpu_custom_call.1} parent=1 // pred_region
      %59 = dma.done [#allocation6], 48
    $region25: #{tpu_custom_call.1} parent=1 // pred_fallthru
      _
    %v60 = vld [vmem:[#allocation2] sm:$0xff]
    %v61 = vld [vmem:[#allocation5] sm:$0xff]
    %v62 = vld [vmem:[#allocation5 + $0x8] sm:$0xff]
    %v63 = vld [vmem:[#allocation5 + $0x10] sm:$0xff]
    %v64 = vld [vmem:[#allocation5 + $0x18] sm:$0xff]
    %v65 = vld [vmem:[#allocation5 + $0x20] sm:$0xf]
    %v66 = vld [vmem:[#allocation7] sm:$0x1]
    %v68 = vperm.slane %v66, 0
    %vm70 = vcmask 293888
    %v72 = vsel %vm70, %v60, 0
    %vm74 = vcmask 1043456
    %v76 = vsel %vm74, %v65, 0
    %78 = vmatpush.msra.mxu0 0.0
    %79 = vmatpush.msra.mxu0 0.0
    %80 = vmatpush.msra.mxu0 0.0
    %81 = vmatpush.msra.mxu0 0.0
    %82 = vmatpush.msra.mxu0 0.0
    %83 = vmatpush.msra.mxu0 0.0
    %84 = vmatpush.msra.mxu0 0.0
    %85 = vmatpush.msra.mxu0 0.0
    %86 = vmatpush.msra.mxu0 0.0
    %87 = vmatpush.msra.mxu0 0.0
    %88 = vmatpush.msra.mxu0 0.0
    %89 = vmatpush.msra.mxu0 %v76
    %90 = vmatpush.msra.mxu0 %v64
    %91 = vmatpush.msra.mxu0 %v63
    %92 = vmatpush.msra.mxu0 %v62
    %93 = vmatpush.msra.mxu0 %v61
    %94 = vmatmul.f32.gmra.mxu0 %v72
    %v95 = vpop.f32.mrf.mxu0
    %v96 = vadd.f32 %v68, %v95
    %97 = vdwg.mxu0
    %v98 = vmul.f32 %v96, 0.2
    %v99 = vmax.f32 %v96, %v98
    %s100 = scalar_lea.vmem [#allocation5], 40
    %v101 = vld [vmem:[%s100] sm:$0xff]
    %v102 = vld [vmem:[%s100 + $0x8] sm:$0xff]
    %v103 = vld [vmem:[%s100 + $0x10] sm:$0xff]
    %v104 = vld [vmem:[%s100 + $0x18] sm:$0xff]
    %v105 = vld [vmem:[%s100 + $0x20] sm:$0xf]
    %s106 = scalar_lea.vmem [#allocation7], 1
    %v107 = vld [vmem:[%s106] sm:$0x1]
    %v109 = vperm.slane %v107, 0
    %v112 = vsel %vm70, %v99, 0
    %v115 = vsel %vm74, %v105, 0
    %117 = vmatpush.msra.mxu0 0.0
    %118 = vmatpush.msra.mxu0 0.0
    %119 = vmatpush.msra.mxu0 0.0
    %120 = vmatpush.msra.mxu0 0.0
    %121 = vmatpush.msra.mxu0 0.0
    %122 = vmatpush.msra.mxu0 0.0
    %123 = vmatpush.msra.mxu0 0.0
    %124 = vmatpush.msra.mxu0 0.0
    %125 = vmatpush.msra.mxu0 0.0
    %126 = vmatpush.msra.mxu0 0.0
    %127 = vmatpush.msra.mxu0 0.0
    %128 = vmatpush.msra.mxu0 %v115
    %129 = vmatpush.msra.mxu0 %v104
    %130 = vmatpush.msra.mxu0 %v103
    %131 = vmatpush.msra.mxu0 %v102
    %132 = vmatpush.msra.mxu0 %v101
    %133 = vmatmul.f32.gmra.mxu0 %v112
    %v134 = vpop.f32.mrf.mxu0
    %v135 = vadd.f32 %v109, %v134
    %136 = vdwg.mxu0
    %v137 = vmul.f32 %v135, 0.2
    %v138 = vmax.f32 %v135, %v137
    %s139 = scalar_lea.vmem [#allocation5], 80
    %v140 = vld [vmem:[%s139] sm:$0xff]
    %v141 = vld [vmem:[%s139 + $0x8] sm:$0xff]
    %v142 = vld [vmem:[%s139 + $0x10] sm:$0xff]
    %v143 = vld [vmem:[%s139 + $0x18] sm:$0xff]
    %v144 = vld [vmem:[%s139 + $0x20] sm:$0xf]
    %s145 = scalar_lea.vmem [#allocation7], 2
    %v146 = vld [vmem:[%s145] sm:$0x1]
    %v148 = vperm.slane %v146, 0
    %v151 = vsel %vm70, %v138, 0
    %v154 = vsel %vm74, %v144, 0
    %156 = vmatpush.msra.mxu0 0.0
    %157 = vmatpush.msra.mxu0 0.0
    %158 = vmatpush.msra.mxu0 0.0
    %159 = vmatpush.msra.mxu0 0.0
    %160 = vmatpush.msra.mxu0 0.0
    %161 = vmatpush.msra.mxu0 0.0
    %162 = vmatpush.msra.mxu0 0.0
    %163 = vmatpush.msra.mxu0 0.0
    %164 = vmatpush.msra.mxu0 0.0
    %165 = vmatpush.msra.mxu0 0.0
    %166 = vmatpush.msra.mxu0 0.0
    %167 = vmatpush.msra.mxu0 %v154
    %168 = vmatpush.msra.mxu0 %v143
    %169 = vmatpush.msra.mxu0 %v142
    %170 = vmatpush.msra.mxu0 %v141
    %171 = vmatpush.msra.mxu0 %v140
    %172 = vmatmul.f32.gmra.mxu0 %v151
    %v173 = vpop.f32.mrf.mxu0
    %v174 = vadd.f32 %v148, %v173
    %175 = vdwg.mxu0
    %176 = vst.msk [vmem:[#allocation8] sm:$0xff] %vm70, %v174
    // Predicated region
    $region26: #{tpu_custom_call.1} parent=1 // pred_check
      _
    $region27: #{tpu_custom_call.1} parent=1 // pred_check_branch
      %178 = sbr.rel (0) target = $region29
    $region28: #{tpu_custom_call.1} parent=1 // pred_region
      %180 = vsyncadd [#allocation4], 0
      %s182 = sshll.u32 [#allocation8], 4
      %s183 = int_to_ptr.vmem [resolvable:$true] %s182
      %s184 = sshll.u32 %s3, 4
      %s185 = int_to_ptr.hbm [resolvable:$true] %s184
      %187 = dma.vmem_to_hbm [thread:$0]  %s183, 128, %s185, [#allocation4]
    $region29: #{tpu_custom_call.1} parent=1 // pred_fallthru
      _
    // Predicated region
    $region30: #{tpu_custom_call.1} parent=1 // pred_check
      _
    $region31: #{tpu_custom_call.1} parent=1 // pred_check_branch
      %189 = sbr.rel (0) target = $region33
    $region32: #{tpu_custom_call.1} parent=1 // pred_region
      %191 = dma.done [#allocation4], 128
    $region33: #{tpu_custom_call.1} parent=1 // pred_fallthru
      _
    %192 = vsyncpa [#allocation3], 1
    %193 = vsyncpa [#allocation6], 1
    %194 = vsyncpa [#allocation4], 1

</llo_original>
